<compile_context>
chip_gen: v6e
topology: v6e:2x2x1
jax: 0.10.0
libtpu: 0.0.40
codegen_flags: <defaults>
</compile_context>

<pallas_src>
import functools

import jax
import jax.numpy as jnp
from jax.experimental import pallas as pl
from jax.experimental.pallas import tpu as pltpu

_LANES = 512                            # lane-dense last dim (multiple of 128)
_TILE_ROWS = 2048                       # 2048 x 512 f32 = 4 MiB per tile buffer
_TILE_ELEMS_1D = _TILE_ROWS * _LANES    # 1-D fallback tile (multiple of 8*128)
_VMEM_LIMIT_BYTES = 32 * 1024 * 1024    # safe on v5e/v6e (128 MiB) and v7x (64 MiB)


def _round_up(x, m):
    return ((x + m - 1) // m) * m


# ---------------------------------------------------------------------------
# Pallas kernel: backward of GradReverse, o = (-alpha) * g
# ---------------------------------------------------------------------------
def _neg_scale_kernel(g_ref, o_ref, *, neg_alpha):
    # Constant baked at trace time in the gradient's dtype -> a single VPU
    # multiply per vreg, no dtype promotion / extra casts.
    o_ref[...] = g_ref[...] * jnp.asarray(neg_alpha, g_ref.dtype)


def _compiler_params():
    return pltpu.CompilerParams(
        dimension_semantics=("parallel",),
        vmem_limit_bytes=_VMEM_LIMIT_BYTES,
    )


def _cost_estimate(n, dtype):
    # One read + one write of the gradient; one multiply per element.
    return pl.CostEstimate(
        flops=n,
        transcendentals=0,
        bytes_accessed=2 * n * jnp.dtype(dtype).itemsize,
    )


def _neg_scale_pallas(g, alpha):
    """Compute -alpha * g with a tiled, mem-bound Pallas kernel (no pad/slice)."""
    orig_shape = g.shape
    dtype = g.dtype
    n = g.size
    kernel = functools.partial(_neg_scale_kernel, neg_alpha=-float(alpha))

    if n % _LANES == 0:
        # Fast path: pure (bitcast) reshape to a lane-dense 2-D slab.
        rows = n // _LANES
        g2d = g.reshape(rows, _LANES)

        if rows >= _TILE_ROWS:
            tile_rows = _TILE_ROWS
        elif rows >= 16:
            # >= 2 grid steps so the "parallel" axis can shard across both
            # TensorCores on v7x; harmless on single-TC v5e/v6e.
            tile_rows = _round_up(pl.cdiv(rows, 2), 8)
        else:
            tile_rows = rows  # full extent, single block

        grid = (pl.cdiv(rows, tile_rows),)
        out2d = pl.pallas_call(
            kernel,
            out_shape=jax.ShapeDtypeStruct((rows, _LANES), dtype),
            grid=grid,
            in_specs=[pl.BlockSpec((tile_rows, _LANES), lambda i: (i, 0))],
            out_specs=pl.BlockSpec((tile_rows, _LANES), lambda i: (i, 0)),
            input_output_aliases={0: 0},  # reuse g's buffer; negate in place
            compiler_params=_compiler_params(),
            cost_estimate=_cost_estimate(n, dtype),
        )(g2d)
        return out2d.reshape(orig_shape)

    # Ragged path: flat 1-D view; Pallas masks the partial tail block, so no
    # jnp.pad on the way in and no slice on the way out.
    flat = g.reshape(-1)
    tile = n if n <= _TILE_ELEMS_1D else _TILE_ELEMS_1D
    grid = (pl.cdiv(n, tile),)
    out_flat = pl.pallas_call(
        kernel,
        out_shape=jax.ShapeDtypeStruct((n,), dtype),
        grid=grid,
        in_specs=[pl.BlockSpec((tile,), lambda i: (i,))],
        out_specs=pl.BlockSpec((tile,), lambda i: (i,)),
        input_output_aliases={0: 0},
        compiler_params=_compiler_params(),
        cost_estimate=_cost_estimate(n, dtype),
    )(flat)
    return out_flat.reshape(orig_shape)


# ---------------------------------------------------------------------------
# custom_vjp reproducing GradReverse.apply(x, alpha)
# ---------------------------------------------------------------------------
@functools.partial(jax.custom_vjp, nondiff_argnums=(1,))
def grad_reverse(x, alpha=1.0):
    # Forward is a pure view/identity: no kernel, no HBM traffic.
    return x


def _grad_reverse_fwd(x, alpha):
    return x, None


def _grad_reverse_bwd(alpha, _res, g):
    return (_neg_scale_pallas(g, alpha),)


grad_reverse.defvjp(_grad_reverse_fwd, _grad_reverse_bwd)


class GradientReversal:
    """JAX/Pallas equivalent of the PyTorch GradientReversal module."""

    def __init__(self, alpha=1.0):
        self.alpha = float(alpha)

    def __call__(self, x):
        return grad_reverse(x, self.alpha)


# ---------------------------------------------------------------------------
# Demo / self-test
# ---------------------------------------------------------------------------
if __name__ == "__main__":
    key = jax.random.PRNGKey(0)

    # --- Case 1: NCHW input, lane-aligned element count (2-D fast path). ---
    x = jax.random.normal(key, (2, 4, 16, 16), dtype=jnp.float32)
    module = GradientReversal(alpha=1.0)

    # Forward: must be identity.
    y = jax.block_until_ready(module(x))
    assert y.shape == x.shape and y.dtype == x.dtype
    assert bool(jnp.allclose(y, x))

    # Backward: grad wrt x must equal -alpha * upstream grad.
    def loss(inp):
        return jnp.sum(module(inp) * 2.0)

    dx = jax.block_until_ready(jax.grad(loss)(x))
    assert dx.shape == x.shape and dx.dtype == x.dtype
    assert bool(jnp.allclose(dx, -2.0 * jnp.ones_like(x)))

    # --- Case 2: multi-block grid (exercises the 2-TC split heuristic). ---
    module_half = GradientReversal(alpha=0.5)
    x3 = jax.random.normal(key, (16, 32, 64), dtype=jnp.float32)  # 32768 elems
    dx3 = jax.block_until_ready(
        jax.grad(lambda a: jnp.sum(module_half(a) * 3.0))(x3))
    assert bool(jnp.allclose(dx3, -1.5 * jnp.ones_like(x3)))

    # --- Case 3: ragged element count (1-D tail-masked path), alpha=1.5. ---
    module2 = GradientReversal(alpha=1.5)
    x2 = jax.random.normal(key, (3, 5, 7), dtype=jnp.float32)  # 105 elems
    dx2 = jax.block_until_ready(jax.grad(lambda a: jnp.sum(module2(a)))(x2))
    assert bool(jnp.allclose(dx2, -1.5 * jnp.ones_like(x2)))

    print("KERNEL_OK")
</pallas_src>

<mosaic_0001>
module attributes {stable_mosaic.version = 11 : i64} {
  func.func @_neg_scale_kernel(%arg0: i32, %arg1: memref<4x512xf32, #tpu.memory_space<vmem>>, %arg2: memref<4x512xf32, #tpu.memory_space<vmem>>) attributes {dimension_semantics = [#tpu.dimension_semantics<parallel>], iteration_bounds = array<i64: 1>, scalar_prefetch = 0 : i64, scratch_operands = 0 : i64, tpu.core_type = #tpu.core_type<tc>, window_params = [{transform_indices = @transform_0, window_bounds = array<i64: 4, 512>}, {transform_indices = @transform_1, window_bounds = array<i64: 4, 512>}]} {
    %c0 = arith.constant 0 : index
    %c0_0 = arith.constant 0 : index
    %0 = vector.load %arg1[%c0, %c0_0] : memref<4x512xf32, #tpu.memory_space<vmem>>, vector<4x512xf32>
    %cst = arith.constant -1.000000e+00 : f32
    %1 = vector.broadcast %cst : f32 to vector<4x512xf32>
    %2 = arith.mulf %0, %1 : vector<4x512xf32>
    %c0_1 = arith.constant 0 : index
    %c0_2 = arith.constant 0 : index
    %3 = vector.load %arg2[%c0_1, %c0_2] : memref<4x512xf32, #tpu.memory_space<vmem>>, vector<4x512xf32>
    tpu.vector_store %arg2[%c0_1, %c0_2], %2 {strides = array<i32>} : memref<4x512xf32, #tpu.memory_space<vmem>>, vector<4x512xf32>,
    return
  }
  func.func @transform_0(%arg0: i32) -> (i32, i32) {
    %c0_i32 = arith.constant 0 : i32
    %c0_i32_0 = arith.constant 0 : i32
    return %arg0, %c0_i32 : i32, i32
  }
  func.func @transform_1(%arg0: i32) -> (i32, i32) {
    %c0_i32 = arith.constant 0 : i32
    %c0_i32_0 = arith.constant 0 : i32
    return %arg0, %c0_i32 : i32, i32
  }
}

</mosaic_0001>

<llo_original>
// kernel: tpu_custom_call.1
$region0: #{tpu_custom_call.1}
  #allocation0 [shape = 'u32[]', space=smem, size = 0x4, offset = 0x4, fixed_abs, tag = 'smem constant byte address 0x4 - core index']
  #allocation1 [shape = 'u32[144,128]{1,0:T(1,128)}', space=vmem, size = 0x12000, scoped, tag = 'internal scratch']
  %s0 = inlined_call_operand.hbm [shape: f32[4,512], index: 0, kind: input, shape index: {}, may-alias: {0,1}]
  %s1 = inlined_call_operand.hbm [shape: f32[4,512], index: 1, kind: output, shape index: {}, may-alias: {0,1}]
  %s2 = sld [smem:[#allocation0]]
  $region18: #{tpu_custom_call.1} parent=0
    _
  %s4 = ssub.s32 1, %s2
  %s5 = scalar_select 0, %s4, %s2
  $region1: #{tpu_custom_call.1} parent=0
    #allocation2 [shape = 'u8[8192]{0}', space=vmem, size = 0x2000, scoped, tag = 'input window, operand 0, single buffered']
    #allocation3 [shape = 's32[1]{0}', space=sflag, size = 0x4, scoped, tag = 'scoped memory for tpu_custom_call.1']
    #allocation4 [shape = 's32[1]{0}', space=sflag, size = 0x4, scoped, tag = 'scoped memory for tpu_custom_call.1']
    #allocation5 [shape = 'u8[8192]{0}', space=vmem, size = 0x2000, scoped, tag = 'output window, operand 0, single buffered']
    %6 = vsyncpa [#allocation3], 0
    %7 = vsyncpa [#allocation4], 0
    // Predicated region
    $region2: #{tpu_custom_call.1} parent=1 // pred_check
      _
    $region3: #{tpu_custom_call.1} parent=1 // pred_check_branch
      %9 = sbr.rel (0) target = $region5
    $region4: #{tpu_custom_call.1} parent=1 // pred_region
      %s11 = ssub.s32 256, 256
      %12 = vsyncadd [#allocation3], %s11
      %s14 = sshll.u32 [#allocation2], 4
      %s15 = int_to_ptr.vmem [resolvable:$true] %s14
      %17 = dma.hbm_to_vmem [thread:$0]  %s0, 256, %s15, [#allocation3]
    $region5: #{tpu_custom_call.1} parent=1 // pred_fallthru
      _
    // Predicated region
    $region6: #{tpu_custom_call.1} parent=1 // pred_check
      _
    $region7: #{tpu_custom_call.1} parent=1 // pred_check_branch
      %19 = sbr.rel (0) target = $region9
    $region8: #{tpu_custom_call.1} parent=1 // pred_region
      %20 = dma.done [#allocation3], 256
    $region9: #{tpu_custom_call.1} parent=1 // pred_fallthru
      _
    %v21 = vld [vmem:[#allocation2] sm:$0xff]
    %v22 = vld [vmem:[#allocation2 + $0x8] sm:$0xff]
    %v23 = vmul.f32 %v21, -1.0
    %v24 = vmul.f32 %v22, -1.0
    %25 = vst [vmem:[#allocation5] sm:$0xff] %v23
    %26 = vst [vmem:[#allocation5 + $0x8] sm:$0xff] %v24
    // Predicated region
    $region10: #{tpu_custom_call.1} parent=1 // pred_check
      _
    $region11: #{tpu_custom_call.1} parent=1 // pred_check_branch
      %28 = sbr.rel (0) target = $region13
    $region12: #{tpu_custom_call.1} parent=1 // pred_region
      %s30 = ssub.s32 256, 256
      %31 = vsyncadd [#allocation4], %s30
      %s33 = sshll.u32 [#allocation5], 4
      %s34 = int_to_ptr.vmem [resolvable:$true] %s33
      %36 = dma.vmem_to_hbm [thread:$0]  %s34, 256, %s1, [#allocation4]
    $region13: #{tpu_custom_call.1} parent=1 // pred_fallthru
      _
    // Predicated region
    $region14: #{tpu_custom_call.1} parent=1 // pred_check
      _
    $region15: #{tpu_custom_call.1} parent=1 // pred_check_branch
      %38 = sbr.rel (0) target = $region17
    $region16: #{tpu_custom_call.1} parent=1 // pred_region
      %39 = dma.done [#allocation4], 256
    $region17: #{tpu_custom_call.1} parent=1 // pred_fallthru
      _
    %40 = vsyncpa [#allocation3], 1
    %41 = vsyncpa [#allocation4], 1

</llo_original>
